<compile_context>
chip_gen: v5e
topology: v5e:2x2
jax: 0.10.0
libtpu: 0.0.40
codegen_flags: <defaults>
</compile_context>

<pallas_src>
import functools

import jax
import jax.numpy as jnp
from jax import lax
from jax.experimental import pallas as pl
from jax.experimental.pallas import tpu as pltpu


LANE = 128
_MIB = 1024 * 1024


def _vmem_capacity_bytes():
    try:
        return int(pltpu.get_tpu_info().vmem_capacity_bytes)
    except Exception:
        return 64 * _MIB  # conservative default (v7x per-core)


def _round_up(v, m):
    return ((v + m - 1) // m) * m


# -----------------------------------------------------------------------------
# Shared tiny MLP on lane-dense pooled stats.
# pooled: (2*nb, C) fp32 rows = [avg..., max...]; w1t: (C, Cr); w2t: (Cr, C)
# returns attn: (nb, C) fp32
# -----------------------------------------------------------------------------
def _mlp_attention(pooled, w1t, w2t, nb):
    h = jnp.maximum(
        jnp.dot(pooled, w1t, preferred_element_type=jnp.float32), 0.0)  # (2nb, Cr)
    out2 = jnp.dot(h, w2t, preferred_element_type=jnp.float32)          # (2nb, C)
    return jax.nn.sigmoid(out2[:nb] + out2[nb:])                        # (nb, C)


# -----------------------------------------------------------------------------
# Single-pass kernel: whole (Bt, C, HW) slab resident per grid step.
# -----------------------------------------------------------------------------
def _ca_fused_kernel(x_ref, w1t_ref, w2t_ref, o_ref):
    x = x_ref[...]                                        # (Bt, C, HW), native dtype
    inv_hw = 1.0 / x.shape[-1]

    # Both pooling reductions from the same resident tile; fp32 only at the
    # (Bt, C)-sized results, never a full fp32 copy of the tile.
    sum_bc = jnp.sum(x, axis=-1, dtype=jnp.float32)       # (Bt, C)
    max_bc = jnp.max(x, axis=-1).astype(jnp.float32)      # (Bt, C)
    pooled = jnp.concatenate([sum_bc * inv_hw, max_bc], axis=0)   # (2*Bt, C)

    attn = _mlp_attention(pooled, w1t_ref[...], w2t_ref[...], x.shape[0])

    # Single store pass; multiply stays in the input dtype (keeps v5e at
    # roofline; bf16 runs apply the scale at bf16 precision).
    o_ref[...] = (x * attn.astype(x.dtype)[:, :, None]).astype(o_ref.dtype)


# -----------------------------------------------------------------------------
# Fused tiled kernel.  grid = (B, 2, n_t).
#   phase 0: accumulate sum/max over HW tiles; at the last tile compute attn.
#   phase 1: re-stream x tiles and apply the scale.
# NOTE: the sum/max/attn scratch accumulators rely on the (phase, t) axes being
# innermost and marked "arbitrary" (sequential per batch, per core).
# -----------------------------------------------------------------------------
def _ca_tiled_kernel(x_ref, w1t_ref, w2t_ref, o_ref,
                     sum_ref, max_ref, attn_ref, *, hw_total, thw):
    phase = pl.program_id(1)
    t = pl.program_id(2)
    n_t = pl.num_programs(2)
    x = x_ref[...]                                        # (C, thw), native dtype

    @pl.when((phase == 0) & (t == 0))
    def _init():
        sum_ref[...] = jnp.zeros_like(sum_ref)
        max_ref[...] = jnp.full_like(max_ref, -jnp.inf)

    @pl.when(phase == 0)
    def _pool():
        if hw_total % thw != 0:
            # Masked tail: the last HW tile is partial (HW need not divide 128).
            valid = hw_total - t * thw                    # in (0, thw] per tile
            mask = lax.broadcasted_iota(jnp.int32, x.shape, 1) < valid
            xs = jnp.where(mask, x, jnp.zeros((), x.dtype))
            xm = jnp.where(mask, x, jnp.full((), -jnp.inf, x.dtype))
        else:
            xs, xm = x, x
        sum_ref[...] += jnp.sum(xs, axis=-1, dtype=jnp.float32)[None, :]
        max_ref[...] = jnp.maximum(
            max_ref[...], jnp.max(xm, axis=-1).astype(jnp.float32)[None, :])

    @pl.when((phase == 0) & (t == n_t - 1))
    def _finalize():
        pooled = jnp.concatenate(
            [sum_ref[...] * (1.0 / hw_total), max_ref[...]], axis=0)   # (2, C)
        attn_ref[...] = _mlp_attention(pooled, w1t_ref[...], w2t_ref[...], 1)

    @pl.when(phase == 1)
    def _scale():
        attn = attn_ref[...].astype(x.dtype)              # (1, C)
        o_ref[...] = (x * attn[0][:, None]).astype(o_ref.dtype)


# -----------------------------------------------------------------------------
# pallas_call wrappers
# -----------------------------------------------------------------------------
def _single_pass(x_flat, w1t, w2t, bt, vmem_limit, donate_input):
    B, C, HW = x_flat.shape
    Cr = w1t.shape[1]
    itemsize = jnp.dtype(x_flat.dtype).itemsize
    cost = pl.CostEstimate(
        flops=int(B * (3 * C * HW + 8 * C * Cr)),
        transcendentals=int(B * C),
        bytes_accessed=int(2 * B * C * HW * itemsize + 8 * C * Cr),
    )
    kwargs = {}
    if donate_input:
        kwargs["input_output_aliases"] = {0: 0}
    return pl.pallas_call(
        _ca_fused_kernel,
        out_shape=jax.ShapeDtypeStruct((B, C, HW), x_flat.dtype),
        grid_spec=pltpu.PrefetchScalarGridSpec(
            num_scalar_prefetch=0,
            grid=(B // bt,),
            in_specs=[
                pl.BlockSpec((bt, C, HW), lambda i: (i, 0, 0)),
                # Constant index maps -> weights are not re-DMA'd per step.
                pl.BlockSpec((C, Cr), lambda i: (0, 0)),
                pl.BlockSpec((Cr, C), lambda i: (0, 0)),
            ],
            out_specs=pl.BlockSpec((bt, C, HW), lambda i: (i, 0, 0)),
        ),
        compiler_params=pltpu.CompilerParams(
            dimension_semantics=("parallel",),
            vmem_limit_bytes=int(vmem_limit),
        ),
        cost_estimate=cost,
        **kwargs,
    )(x_flat, w1t, w2t)


def _tiled(x_flat, w1t, w2t, thw, vmem_limit, donate_input):
    B, C, HW = x_flat.shape
    Cr = w1t.shape[1]
    n_t = pl.cdiv(HW, thw)
    itemsize = jnp.dtype(x_flat.dtype).itemsize
    kernel = functools.partial(_ca_tiled_kernel, hw_total=HW, thw=thw)
    cost = pl.CostEstimate(
        flops=int(B * (3 * C * HW + 8 * C * Cr)),
        transcendentals=int(B * C),
        bytes_accessed=int(3 * B * C * HW * itemsize + 8 * C * Cr),
    )
    kwargs = {}
    if donate_input:
        kwargs["input_output_aliases"] = {0: 0}
    return pl.pallas_call(
        kernel,
        out_shape=jax.ShapeDtypeStruct((B, C, HW), x_flat.dtype),
        grid_spec=pltpu.PrefetchScalarGridSpec(
            num_scalar_prefetch=0,
            grid=(B, 2, n_t),
            in_specs=[
                pl.BlockSpec((pl.Squeezed(), C, thw), lambda b, p, t: (b, 0, t)),
                pl.BlockSpec((C, Cr), lambda b, p, t: (0, 0)),
                pl.BlockSpec((Cr, C), lambda b, p, t: (0, 0)),
            ],
            # Pin the output block to (b,0,0) during phase 0 so no garbage block
            # is ever flushed; every HBM output block is written exactly once
            # (by phase 1).
            out_specs=pl.BlockSpec((pl.Squeezed(), C, thw),
                                   lambda b, p, t: (b, 0, t * p)),
            scratch_shapes=[pltpu.VMEM((1, C), jnp.float32),   # running sum
                            pltpu.VMEM((1, C), jnp.float32),   # running max
                            pltpu.VMEM((1, C), jnp.float32)],  # attention
        ),
        compiler_params=pltpu.CompilerParams(
            dimension_semantics=("parallel", "arbitrary", "arbitrary"),
            vmem_limit_bytes=int(vmem_limit),
        ),
        cost_estimate=cost,
        **kwargs,
    )(x_flat, w1t, w2t)


def channel_attention(x, w1, w2, *, force_tiled=False, donate_input=False,
                      _tile_hw=None):
    """x: (B, C, H, W) NCHW; w1: (Cr, C); w2: (C, Cr). Returns (B, C, H, W).

    _tile_hw is a test-only override for the tiled-path HW tile width.
    """
    B, C, H, W = x.shape
    HW = H * W
    Cr = w1.shape[0]
    x_flat = x.reshape(B, C, HW)
    # Pre-transpose / pre-cast the tiny MLP weights once outside the kernel.
    w1t = jnp.asarray(w1, jnp.float32).T          # (C, Cr)
    w2t = jnp.asarray(w2, jnp.float32).T          # (Cr, C)

    itemsize = jnp.dtype(x_flat.dtype).itemsize
    vmem_cap = _vmem_capacity_bytes()
    weight_bytes = 2 * (C * Cr * 4) * 2           # two fp32 weights, x2 buffers
    fixed_bytes = weight_bytes + (1 << 20)        # weights + misc margin

    per_image = C * HW * itemsize
    # Single-pass keeps x + out blocks resident, each double-buffered; use a
    # 0.65 budget fraction so we never fall back to single-buffering (the
    # crossover halves on v7x's 64 MiB VMEM).
    crossover_budget = int(vmem_cap * 0.65)
    single_pass_ok = (4 * per_image + fixed_bytes) <= crossover_budget

    if force_tiled or (not single_pass_ok and HW > LANE):
        # Fused HW-tiled path.  Tile width derived from the actual VMEM budget
        # (x + out double-buffered => 4 * C * thw * itemsize per step).
        budget = int(vmem_cap * 0.75)
        if _tile_hw is not None:
            thw = int(_tile_hw)
        else:
            thw = (budget - fixed_bytes) // max(4 * C * itemsize, 1)
        thw = max(LANE, (thw // LANE) * LANE)
        thw = min(thw, _round_up(HW, LANE))
        block_bytes = 4 * C * thw * itemsize + fixed_bytes + (2 << 20)
        vmem_limit = min(max(block_bytes, 32 * _MIB), int(vmem_cap * 0.9))
        out = _tiled(x_flat, w1t, w2t, thw, vmem_limit, donate_input)
    else:
        # Single-pass path.  Block several batch elements per grid step when
        # the per-image slab is small (amortizes per-step overhead, bigger DMAs).
        step_target = min(crossover_budget, 16 * _MIB)
        bt_cap = max(1, (step_target - fixed_bytes) // max(4 * per_image, 1))
        bt = 1
        for cand in range(min(B, bt_cap), 0, -1):
            if B % cand == 0:
                bt = cand
                break
        block_bytes = 4 * bt * per_image + fixed_bytes + (2 << 20)
        vmem_limit = min(max(block_bytes, 32 * _MIB), int(vmem_cap * 0.95))
        # TODO(synk): shapes with HW <= 128 whose (C, HW) slab still busts VMEM
        # (C in the tens of thousands) would need a C-tiled variant; they fall
        # through here with a raised limit.
        out = _single_pass(x_flat, w1t, w2t, bt, vmem_limit, donate_input)
    return out.reshape(B, C, H, W)


# -----------------------------------------------------------------------------
# Pure-JAX reference (matches the PyTorch module).
# -----------------------------------------------------------------------------
def _reference(x, w1, w2):
    avg_p = jnp.mean(x, axis=(2, 3))              # (B, C)
    max_p = jnp.max(x, axis=(2, 3))               # (B, C)

    def fc(p):
        h = jnp.maximum(p @ w1.T, 0.0)            # (B, Cr)
        return h @ w2.T                           # (B, C)

    attn = jax.nn.sigmoid(fc(avg_p) + fc(max_p))
    return x * attn[:, :, None, None]


if __name__ == "__main__":
    key = jax.random.PRNGKey(0)
    kx, k1, k2, kx2, k3, k4 = jax.random.split(key, 6)

    # ---- Spec-consistent small shape: B=2, C=4, H=W=16, reduction=16 -> Cr=1.
    B, C, H, W = 2, 4, 16, 16
    reduction = 16
    Cr = max(C // reduction, 1)

    x = jax.random.normal(kx, (B, C, H, W), dtype=jnp.float32)
    w1 = jax.random.normal(k1, (Cr, C), dtype=jnp.float32) * 0.5  # Conv2d(C, Cr, 1)
    w2 = jax.random.normal(k2, (C, Cr), dtype=jnp.float32) * 0.5  # Conv2d(Cr, C, 1)

    ref = _reference(x, w1, w2)

    # Main (single-pass, batch-blocked) path.
    out = jax.block_until_ready(channel_attention(x, w1, w2))
    assert out.shape == (B, C, H, W)
    assert jnp.allclose(out, ref, atol=1e-5, rtol=1e-5), "single-pass mismatch"

    # Fused tiled path on the same shape (single HW tile, no masking).
    out_t = jax.block_until_ready(channel_attention(x, w1, w2, force_tiled=True))
    assert jnp.allclose(out_t, ref, atol=1e-5, rtol=1e-5), "tiled path mismatch"

    # Fused tiled path with a non-128-divisible HW (14x14 = 196) and a forced
    # 128-wide tile -> multi-tile accumulation with a masked tail.
    B2, C2, H2, W2 = 2, 8, 14, 14
    Cr2 = max(C2 // 4, 1)
    x2 = jax.random.normal(kx2, (B2, C2, H2, W2), dtype=jnp.float32)
    w1b = jax.random.normal(k3, (Cr2, C2), dtype=jnp.float32) * 0.5
    w2b = jax.random.normal(k4, (C2, Cr2), dtype=jnp.float32) * 0.5
    ref2 = _reference(x2, w1b, w2b)
    out2 = jax.block_until_ready(
        channel_attention(x2, w1b, w2b, force_tiled=True, _tile_hw=128))
    assert jnp.allclose(out2, ref2, atol=1e-5, rtol=1e-5), "masked-tail mismatch"

    print("KERNEL_OK")
</pallas_src>

<mosaic_0001>
module attributes {stable_mosaic.version = 11 : i64} {
  func.func @_ca_fused_kernel(%arg0: i32, %arg1: memref<2x4x256xf32, #tpu.memory_space<vmem>>, %arg2: memref<4x1xf32, #tpu.memory_space<vmem>>, %arg3: memref<1x4xf32, #tpu.memory_space<vmem>>, %arg4: memref<2x4x256xf32, #tpu.memory_space<vmem>>) attributes {dimension_semantics = [#tpu.dimension_semantics<parallel>], iteration_bounds = array<i64: 1>, scalar_prefetch = 0 : i64, scratch_operands = 0 : i64, tpu.core_type = #tpu.core_type<tc>, window_params = [{transform_indices = @transform_0, window_bounds = array<i64: 2, 4, 256>}, {pipeline_mode = #tpu.pipeline_mode<synchronous>, transform_indices = @transform_1, window_bounds = array<i64: 4, 1>}, {pipeline_mode = #tpu.pipeline_mode<synchronous>, transform_indices = @transform_2, window_bounds = array<i64: 1, 4>}, {transform_indices = @transform_3, window_bounds = array<i64: 2, 4, 256>}]} {
    %c0 = arith.constant 0 : index
    %c0_0 = arith.constant 0 : index
    %c0_1 = arith.constant 0 : index
    %0 = vector.load %arg1[%c0, %c0_0, %c0_1] : memref<2x4x256xf32, #tpu.memory_space<vmem>>, vector<2x4x256xf32>
    %cst = arith.constant dense<0.000000e+00> : vector<2x4xf32>
    %1 = vector.multi_reduction <add>, %0, %cst [2] : vector<2x4x256xf32> to vector<2x4xf32>
    %cst_2 = arith.constant dense<0xFF800000> : vector<2x4xf32>
    %2 = vector.multi_reduction <maximumf>, %0, %cst_2 [2] : vector<2x4x256xf32> to vector<2x4xf32>
    %cst_3 = arith.constant 3.906250e-03 : f32
    %3 = vector.broadcast %cst_3 : f32 to vector<2x4xf32>
    %4 = arith.mulf %1, %3 : vector<2x4xf32>
    %5 = tpu.concatenate %4, %2 in 0 : vector<2x4xf32>, vector<2x4xf32> -> vector<4x4xf32>
    %c0_4 = arith.constant 0 : index
    %c0_5 = arith.constant 0 : index
    %6 = vector.load %arg2[%c0_4, %c0_5] : memref<4x1xf32, #tpu.memory_space<vmem>>, vector<4x1xf32>
    %c0_6 = arith.constant 0 : index
    %c0_7 = arith.constant 0 : index
    %7 = vector.load %arg3[%c0_6, %c0_7] : memref<1x4xf32, #tpu.memory_space<vmem>>, vector<1x4xf32>
    %cst_8 = arith.constant dense<0.000000e+00> : vector<4x1xf32>
    %8 = tpu.matmul %5, %6, %cst_8 {dimension_numbers = #tpu.dot_dimension_numbers<[1], [0], [0], [1], [0, 0, 1, 1], [], []>} : vector<4x4xf32>, vector<4x1xf32>, vector<4x1xf32> -> vector<4x1xf32>
    %cst_9 = arith.constant 0.000000e+00 : f32
    %9 = vector.broadcast %cst_9 : f32 to vector<4x1xf32>
    %10 = arith.maximumf %8, %9 : vector<4x1xf32>
    %cst_10 = arith.constant dense<0.000000e+00> : vector<4x4xf32>
    %11 = tpu.matmul %10, %7, %cst_10 {dimension_numbers = #tpu.dot_dimension_numbers<[1], [0], [0], [1], [0, 0, 1, 1], [], []>} : vector<4x1xf32>, vector<1x4xf32>, vector<4x4xf32> -> vector<4x4xf32>
    %12 = vector.extract_strided_slice %11 {offsets = [0, 0], sizes = [2, 4], strides = [1, 1]} : vector<4x4xf32> to vector<2x4xf32>
    %13 = vector.extract_strided_slice %11 {offsets = [2, 0], sizes = [2, 4], strides = [1, 1]} : vector<4x4xf32> to vector<2x4xf32>
    %14 = arith.addf %12, %13 : vector<2x4xf32>
    %15 = arith.negf %14 : vector<2x4xf32>
    %16 = math.exp %15 : vector<2x4xf32>
    %cst_11 = arith.constant 1.000000e+00 : f32
    %17 = vector.broadcast %cst_11 : f32 to vector<2x4xf32>
    %18 = arith.addf %17, %16 : vector<2x4xf32>
    %19 = arith.divf %17, %18 : vector<2x4xf32>
    %20 = vector.shape_cast %19 : vector<2x4xf32> to vector<2x4x1xf32>
    %21 = vector.broadcast %20 : vector<2x4x1xf32> to vector<2x4x256xf32>
    %22 = arith.mulf %0, %21 : vector<2x4x256xf32>
    %c0_12 = arith.constant 0 : index
    %c0_13 = arith.constant 0 : index
    %c0_14 = arith.constant 0 : index
    %23 = vector.load %arg4[%c0_12, %c0_13, %c0_14] : memref<2x4x256xf32, #tpu.memory_space<vmem>>, vector<2x4x256xf32>
    tpu.vector_store %arg4[%c0_12, %c0_13, %c0_14], %22 {strides = array<i32>} : memref<2x4x256xf32, #tpu.memory_space<vmem>>, vector<2x4x256xf32>,
    return
  }
  func.func @transform_0(%arg0: i32) -> (i32, i32, i32) {
    %c0_i32 = arith.constant 0 : i32
    %c0_i32_0 = arith.constant 0 : i32
    %c0_i32_1 = arith.constant 0 : i32
    return %arg0, %c0_i32, %c0_i32_0 : i32, i32, i32
  }
  func.func @transform_1(%arg0: i32) -> (i32, i32) {
    %c0_i32 = arith.constant 0 : i32
    %c0_i32_0 = arith.constant 0 : i32
    %c0_i32_1 = arith.constant 0 : i32
    return %c0_i32, %c0_i32_0 : i32, i32
  }
  func.func @transform_2(%arg0: i32) -> (i32, i32) {
    %c0_i32 = arith.constant 0 : i32
    %c0_i32_0 = arith.constant 0 : i32
    %c0_i32_1 = arith.constant 0 : i32
    return %c0_i32, %c0_i32_0 : i32, i32
  }
  func.func @transform_3(%arg0: i32) -> (i32, i32, i32) {
    %c0_i32 = arith.constant 0 : i32
    %c0_i32_0 = arith.constant 0 : i32
    %c0_i32_1 = arith.constant 0 : i32
    return %arg0, %c0_i32, %c0_i32_0 : i32, i32, i32
  }
}

</mosaic_0001>

<llo_original>
// kernel: tpu_custom_call.1
$region0: #{tpu_custom_call.1}
  #allocation0 [shape = 'u32[]', space=smem, size = 0x4, offset = 0x4, fixed_abs, tag = 'smem constant byte address 0x4 - core index']
  #allocation1 [shape = 'u32[72,128]{1,0:T(1,128)}', space=vmem, size = 0x9000, scoped, tag = 'internal scratch']
  %s0 = inlined_call_operand.hbm [shape: f32[2,4,256], index: 0, kind: input, shape index: {}]
  %s1 = inlined_call_operand.vmem [shape: f32[4,1], index: 1, kind: input, shape index: {}]
  %s2 = inlined_call_operand.vmem [shape: f32[1,4], index: 2, kind: input, shape index: {}]
  %s3 = inlined_call_operand.hbm [shape: f32[2,4,256], index: 3, kind: output, shape index: {}]
  %s4 = sld [smem:[#allocation0]]
  $region26: #{tpu_custom_call.1} parent=0
    _
  %s6 = ssub.s32 1, %s4
  %s7 = scalar_select 0, %s6, %s4
  $region1: #{tpu_custom_call.1} parent=0
    #allocation2 [shape = 'u8[8192]{0}', space=vmem, size = 0x2000, scoped, tag = 'input window, operand 0, single buffered']
    #allocation3 [shape = 's32[1]{0}', space=sflag, size = 0x4, scoped, tag = 'scoped memory for tpu_custom_call.1']
    #allocation4 [shape = 's32[1]{0}', space=sflag, size = 0x4, scoped, tag = 'scoped memory for tpu_custom_call.1']
    #allocation5 [shape = 'u8[8192]{0}', space=vmem, size = 0x2000, scoped, tag = 'output window, operand 0, single buffered']
    %8 = vsyncpa [#allocation3], 0
    %9 = vsyncpa [#allocation4], 0
    // Predicated region
    $region2: #{tpu_custom_call.1} parent=1 // pred_check
      _
    $region3: #{tpu_custom_call.1} parent=1 // pred_check_branch
      %11 = sbr.rel (0) target = $region5
    $region4: #{tpu_custom_call.1} parent=1 // pred_region
      %13 = vsyncadd [#allocation3], 0
      %s14 = sshll.u32 %s0, 4
      %s15 = int_to_ptr.hbm [resolvable:$true] %s14
      %s16 = sshll.u32 [#allocation2], 4
      %s17 = int_to_ptr.vmem [resolvable:$true] %s16
      %22 = dma.hbm_to_vmem [thread:$0]  %s15, 256, %s17, [#allocation3], 128, 128, 8
    $region5: #{tpu_custom_call.1} parent=1 // pred_fallthru
      _
    // Predicated region
    $region6: #{tpu_custom_call.1} parent=1 // pred_check
      _
    $region7: #{tpu_custom_call.1} parent=1 // pred_check_branch
      %24 = sbr.rel (0) target = $region9
    $region8: #{tpu_custom_call.1} parent=1 // pred_region
      _
    $region9: #{tpu_custom_call.1} parent=1 // pred_fallthru
      _
    // Predicated region
    $region10: #{tpu_custom_call.1} parent=1 // pred_check
      _
    $region11: #{tpu_custom_call.1} parent=1 // pred_check_branch
      %26 = sbr.rel (0) target = $region13
    $region12: #{tpu_custom_call.1} parent=1 // pred_region
      _
    $region13: #{tpu_custom_call.1} parent=1 // pred_fallthru
      _
    // Predicated region
    $region14: #{tpu_custom_call.1} parent=1 // pred_check
      _
    $region15: #{tpu_custom_call.1} parent=1 // pred_check_branch
      %28 = sbr.rel (0) target = $region17
    $region16: #{tpu_custom_call.1} parent=1 // pred_region
      %30 = dma.done [#allocation3], 256
    $region17: #{tpu_custom_call.1} parent=1 // pred_fallthru
      _
    %v31 = vld [vmem:[#allocation2] sm:$0xff]
    %v32 = vld [vmem:[#allocation2 + $0x8] sm:$0xff]
    %35 = vst [vmem:[#allocation1] ss:$2 sm:$0xff] %v31
    %v36 = vld.sshfl [vmem:[#allocation1] sm:$0xff pattern:$0x75316420]
    %v37 = vld.sshfl [vmem:[#allocation1 + $0x8] sm:$0xff pattern:$0x75316420]
    %s38 = scalar_lea.vmem [#allocation1], 16
    %39 = vst [vmem:[%s38] ss:$2 sm:$0xff] %v32
    %v40 = vld.sshfl [vmem:[#allocation1 + $0x10] sm:$0xff pattern:$0x75316420]
    %v41 = vld.sshfl [vmem:[#allocation1 + $0x18] sm:$0xff pattern:$0x75316420]
    %vm46 = vcmask 1043456
    %v47 = vsel %vm46, %v36, 0.0
    %v48 = vsel %vm46, %v37, 0.0
    %v49 = vadd.f32 %v47, %v48
    %50 = vadd.xlane.f32.xlu0 %v49
    %v51 = vpop.xlane.xlu0 %50
    %v52 = vsel %vm46, %v40, 0.0
    %v53 = vsel %vm46, %v41, 0.0
    %v54 = vadd.f32 %v52, %v53
    %55 = vadd.xlane.f32.xlu0 %v54
    %v56 = vpop.xlane.xlu0 %55
    %57 = vst [vmem:[#allocation1] ss:$2 sm:$0xff] %v31
    %v58 = vld.sshfl [vmem:[#allocation1] sm:$0xff pattern:$0x75316420]
    %v59 = vld.sshfl [vmem:[#allocation1 + $0x8] sm:$0xff pattern:$0x75316420]
    %s60 = scalar_lea.vmem [#allocation1], 16
    %61 = vst [vmem:[%s60] ss:$2 sm:$0xff] %v32
    %v62 = vld.sshfl [vmem:[#allocation1 + $0x10] sm:$0xff pattern:$0x75316420]
    %v63 = vld.sshfl [vmem:[#allocation1 + $0x18] sm:$0xff pattern:$0x75316420]
    %v68 = vsel %vm46, %v58, -inf
    %v69 = vsel %vm46, %v59, -inf
    %v70 = vmax.f32 %v68, %v69
    %71 = vmax.xlane.f32.xlu0 %v70
    %v72 = vpop.xlane.xlu0 %71
    %v73 = vsel %vm46, %v62, -inf
    %v74 = vsel %vm46, %v63, -inf
    %v75 = vmax.f32 %v73, %v74
    %76 = vmax.xlane.f32.xlu0 %v75
    %v77 = vpop.xlane.xlu0 %76
    %v78 = vmul.f32 %v51, 0.00390625
    %v79 = vmul.f32 %v56, 0.00390625
    %v82 = vlaneseq
    %v83 = vand.u32 %v82, 127
    %v84 = vperm.slane %v78, %v83
    %v85 = vperm.slane %v79, %v83
    %vm86 = vcmask 1041409
    %v87 = vsel %vm86, %v85, %v84
    %v91 = vperm.slane %v72, %v83
    %v92 = vperm.slane %v77, %v83
    %vm93 = vcmask 1043459
    %v94 = vsel %vm93, %v92, %v91
    %vm96 = vcmask 1041408
    %v97 = vsel %vm96, %v87, %v94
    %v98 = vld [vmem:[%s1] sm:$0xf]
    %v99 = vld [vmem:[%s2] sm:$0x1]
    %vm100 = vcmask 31744
    %v102 = vsel %vm100, %v97, 0
    %v105 = vsel %vm46, %v98, 0
    %107 = vmatpush.msra.mxu0 0.0
    %108 = vmatpush.msra.mxu0 0.0
    %109 = vmatpush.msra.mxu0 0.0
    %110 = vmatpush.msra.mxu0 0.0
    %111 = vmatpush.msra.mxu0 0.0
    %112 = vmatpush.msra.mxu0 0.0
    %113 = vmatpush.msra.mxu0 0.0
    %114 = vmatpush.msra.mxu0 0.0
    %115 = vmatpush.msra.mxu0 0.0
    %116 = vmatpush.msra.mxu0 0.0
    %117 = vmatpush.msra.mxu0 0.0
    %118 = vmatpush.msra.mxu0 0.0
    %119 = vmatpush.msra.mxu0 0.0
    %120 = vmatpush.msra.mxu0 0.0
    %121 = vmatpush.msra.mxu0 0.0
    %122 = vmatpush.msra.mxu0 %v105
    %123 = vmatmul.f32.gmra.mxu0 %v102
    %v124 = vpop.f32.mrf.mxu0
    %v125 = vadd.f32 0.0, %v124
    %126 = vdwg.mxu0
    %v127 = vmax.f32 %v125, 0.0
    %vm128 = vcmask 7168
    %v130 = vsel %vm128, %v127, 0
    %vm132 = vcmask 1040384
    %v134 = vsel %vm132, %v99, 0
    %136 = vmatpush.msra.mxu0 0.0
    %137 = vmatpush.msra.mxu0 0.0
    %138 = vmatpush.msra.mxu0 0.0
    %139 = vmatpush.msra.mxu0 0.0
    %140 = vmatpush.msra.mxu0 0.0
    %141 = vmatpush.msra.mxu0 0.0
    %142 = vmatpush.msra.mxu0 0.0
    %143 = vmatpush.msra.mxu0 0.0
    %144 = vmatpush.msra.mxu0 0.0
    %145 = vmatpush.msra.mxu0 0.0
    %146 = vmatpush.msra.mxu0 0.0
    %147 = vmatpush.msra.mxu0 0.0
    %148 = vmatpush.msra.mxu0 0.0
    %149 = vmatpush.msra.mxu0 0.0
    %150 = vmatpush.msra.mxu0 0.0
    %151 = vmatpush.msra.mxu0 %v134
    %152 = vmatmul.f32.gmra.mxu0 %v130
    %v153 = vpop.f32.mrf.mxu0
    %v154 = vadd.f32 0.0, %v153
    %155 = vdwg.mxu0
    %v157 = vrot.slane %v154, 2
    %v159 = vadd.f32 %v154, %v157
    %v160 = vxor.u32 %v159, 2147483648
    %v161 = vmul.f32 %v160, 1.442695
    %v162 = vpow.pop %v161
    %v163 = vadd.f32 %v162, 1.0
    %v164 = vrcp.pop %v163
    %v165 = vmul.f32 %v163, %v164
    %v166 = vsub.f32 1.0, %v165
    %v167 = vmul.f32 %v164, %v166
    %v168 = vadd.f32 %v164, %v167
    %vm169 = vweird.f32 %v163
    %vm170 = vweird.f32 %v164
    %vm171 = vmor %vm169, %vm170
    %v172 = vsel %vm171, %v164, %v168
    %v173 = vand.u32 2147483647, %v163
    %vm174 = vcmp.eq.f32.partialorder %v173, 8.507059e+37
    %v175 = vand.u32 %v163, 2147483648
    %v176 = vor.u32 1.1754944e-38, %v175
    %v177 = vsel %vm174, %v176, %v172
    %v178 = vmul.f32 1.0, %v177
    %v179 = vperm.slane %v178, 0
    %v180 = vlaneseq
    %v181 = vshrl.u32 %v180, 7
    %183 = vset.pattern.permute.xlu0 %v181
    %184 = vperm.xlu0 %183, %v179
    %v185 = vpop.permute.xlu0 %184
    %v186 = vperm.slane %v178, 1
    %v187 = vlaneseq
    %v188 = vshrl.u32 %v187, 7
    %190 = vset.pattern.permute.xlu0 %v188
    %191 = vperm.xlu0 %190, %v186
    %v192 = vpop.permute.xlu0 %191
    %v196 = vunpack.c.l.s4 839922192
    %v197 = vunpack.c.0.s8 %v196
    %v198 = vperm.slane %v185, %v197
    %v200 = vunpack.c.l.s4 839922192
    %v201 = vunpack.c.0.s8 %v200
    %v202 = vperm.slane %v192, %v201
    %v205 = vmul.f32 %v31, %v198
    %v206 = vmul.f32 %v32, %v202
    %207 = vst [vmem:[#allocation5] sm:$0xff] %v205
    %208 = vst [vmem:[#allocation5 + $0x8] sm:$0xff] %v206
    // Predicated region
    $region18: #{tpu_custom_call.1} parent=1 // pred_check
      _
    $region19: #{tpu_custom_call.1} parent=1 // pred_check_branch
      %210 = sbr.rel (0) target = $region21
    $region20: #{tpu_custom_call.1} parent=1 // pred_region
      %212 = vsyncadd [#allocation4], 0
      %s213 = sshll.u32 [#allocation5], 4
      %s214 = int_to_ptr.vmem [resolvable:$true] %s213
      %s215 = sshll.u32 %s3, 4
      %s216 = int_to_ptr.hbm [resolvable:$true] %s215
      %221 = dma.vmem_to_hbm [thread:$0]  %s214, 256, %s216, [#allocation4], 128, 128, 8
    $region21: #{tpu_custom_call.1} parent=1 // pred_fallthru
      _
    // Predicated region
    $region22: #{tpu_custom_call.1} parent=1 // pred_check
      _
    $region23: #{tpu_custom_call.1} parent=1 // pred_check_branch
      %223 = sbr.rel (0) target = $region25
    $region24: #{tpu_custom_call.1} parent=1 // pred_region
      %225 = dma.done [#allocation4], 256
    $region25: #{tpu_custom_call.1} parent=1 // pred_fallthru
      _
    %226 = vsyncpa [#allocation3], 1
    %227 = vsyncpa [#allocation4], 1

</llo_original>
